<compile_context>
chip_gen: v5e
topology: v5e:2x2
jax: 0.10.0
libtpu: 0.0.40
codegen_flags: <defaults>
</compile_context>

<pallas_src>
import jax
import jax.numpy as jnp
from jax.experimental import pallas as pl
from jax.experimental.pallas import tpu as pltpu


LANE = 128  # vreg lane width; all output feature dims are padded to this.


def _round_up(n, m):
    return ((n + m - 1) // m) * m


def predictor_kernel(x_ref,
                     w1_ref, t1_ref,
                     w2_ref, t2_ref,
                     w3_ref, b3_ref,
                     out_ref):
    """Fused 3-layer MLP head: (Linear+BN+ReLU) x2 -> Linear (lane-padded)."""
    x = x_ref[...]  # (tb, F) bf16, cast in the wrapper

    # Layer 1: Linear(F, F_pad) + folded BN + ReLU  (Dropout eval == identity)
    h = jnp.dot(x, w1_ref[...], preferred_element_type=jnp.float32)
    h = jnp.maximum(h + t1_ref[...], 0.0)

    # Layer 2: Linear(F_pad, H_pad) + folded BN + ReLU
    h = jnp.dot(h.astype(jnp.bfloat16), w2_ref[...],
                preferred_element_type=jnp.float32)
    h = jnp.maximum(h + t2_ref[...], 0.0)

    # Layer 3: Linear(H_pad, C_pad); C padded to 128 lanes -> unmasked vst.
    out = jnp.dot(h.astype(jnp.bfloat16), w3_ref[...],
                  preferred_element_type=jnp.float32) + b3_ref[...]
    out_ref[...] = out.astype(out_ref.dtype)


def fold_params(params, eps=1e-5):
    """One-time parameter glue (hoisted out of the hot path).

    Folds eval-mode BatchNorm into the Linear layers, zero-pads every output
    feature dim (and matching input rows) up to 128-lane multiples, and casts
    weights to bf16. Padded shift lanes are zero so ReLU(0)=0 and the extra
    lanes contribute nothing downstream.
    """
    F = params["w1"].shape[0]
    H = params["w2"].shape[1]
    C = params["w3"].shape[1]
    Fp, Hp, Cp = (_round_up(d, LANE) for d in (F, H, C))

    #   (x @ W + b) * s + t  ==  x @ (W * s) + (t + b * s)
    s1 = params["bn1_gamma"] / jnp.sqrt(params["bn1_var"] + eps)
    s2 = params["bn2_gamma"] / jnp.sqrt(params["bn2_var"] + eps)
    w1 = params["w1"] * s1[None, :]
    w2 = params["w2"] * s2[None, :]
    t1 = params["bn1_beta"] + (params["b1"] - params["bn1_mean"]) * s1
    t2 = params["bn2_beta"] + (params["b2"] - params["bn2_mean"]) * s2

    w1p = jnp.zeros((F, Fp), jnp.bfloat16).at[:, :F].set(w1.astype(jnp.bfloat16))
    t1p = jnp.zeros((1, Fp), jnp.float32).at[:, :F].set(t1.astype(jnp.float32))
    w2p = jnp.zeros((Fp, Hp), jnp.bfloat16).at[:F, :H].set(w2.astype(jnp.bfloat16))
    t2p = jnp.zeros((1, Hp), jnp.float32).at[:, :H].set(t2.astype(jnp.float32))
    w3p = jnp.zeros((Hp, Cp), jnp.bfloat16).at[:H, :C].set(
        params["w3"].astype(jnp.bfloat16))
    b3p = jnp.zeros((1, Cp), jnp.float32).at[:, :C].set(
        params["b3"].astype(jnp.float32))

    return dict(w1=w1p, t1=t1p, w2=w2p, t2=t2p, w3=w3p, b3=b3p,
                num_features=F, num_classes=C)


def predictor_forward(x, folded, *, block_b=256):
    """x: (B, F) float32.  folded: output of fold_params().

    block_b: batch tile target. v5e: 128 (MXU is 128-wide, 1 vst slot);
    v6e/v7x: 256-512 (256-wide MXU, amortizes ~0.35us/grid-step overhead).
    """
    B, F = x.shape
    C = folded["num_classes"]
    Fp = folded["w1"].shape[1]
    Hp = folded["w2"].shape[1]
    Cp = folded["w3"].shape[1]

    # Batch tile: multiple of 16 (bf16 sublane packing). Prefer >= 2 grid steps
    # so both v7x TensorCores get work on the "parallel" batch axis.
    tb = min(_round_up(block_b, 16), _round_up(B, 16))
    if B > 16 and pl.cdiv(B, tb) < 2:
        tb = _round_up(pl.cdiv(B, 2), 16)
    b_pad = _round_up(B, tb)

    # Stream the activations as bf16 -> halves the per-step input DMA bytes.
    x_bf = x.astype(jnp.bfloat16)
    if b_pad != B:
        x_bf = jnp.pad(x_bf, ((0, b_pad - B), (0, 0)))

    args = (x_bf,
            folded["w1"], folded["t1"],
            folded["w2"], folded["t2"],
            folded["w3"], folded["b3"])

    flops = 2 * b_pad * (F * Fp + Fp * Hp + Hp * Cp)
    bytes_accessed = (int(x_bf.size) * 2 + b_pad * Cp * 2
                      + sum(int(a.size) * a.dtype.itemsize for a in args[1:]))
    cost = pl.CostEstimate(flops=flops, transcendentals=0,
                           bytes_accessed=bytes_accessed)

    def build(single_buffer_weights):
        def resident(a):
            # Constant block index across the grid -> weights stay VMEM-resident.
            if single_buffer_weights:
                return pl.BlockSpec(a.shape, lambda i: (0,) * a.ndim,
                                    pipeline_mode=pl.Buffered(1))
            return pl.BlockSpec(a.shape, lambda i: (0,) * a.ndim)

        return pl.pallas_call(
            predictor_kernel,
            out_shape=jax.ShapeDtypeStruct((b_pad, Cp), jnp.bfloat16),
            grid=(b_pad // tb,),
            in_specs=[pl.BlockSpec((tb, F), lambda i: (i, 0))]
                     + [resident(a) for a in args[1:]],
            out_specs=pl.BlockSpec((tb, Cp), lambda i: (i, 0)),
            compiler_params=pltpu.CompilerParams(
                dimension_semantics=("parallel",),
                vmem_limit_bytes=48 * 1024 * 1024),
            cost_estimate=cost,
        )

    try:
        # Single-buffer the never-changing weight blocks (saves VMEM, esp. v7x).
        out = build(True)(*args)
    except Exception:
        # Fallback: default double-buffered pipeline if Buffered(1) is not
        # supported by this JAX/TPU combination.
        out = build(False)(*args)

    return out[:B, :C].astype(jnp.float32)


def make_params(key, num_features, num_classes=3):
    """Deterministic synthetic parameters matching the module's shapes."""
    F = num_features
    H = F // 2
    ks = jax.random.split(key, 8)

    def lin(k, fan_in, fan_out):
        bound = 1.0 / jnp.sqrt(fan_in)
        kw, kb = jax.random.split(k)
        # stored as (in, out) = transpose of torch's nn.Linear.weight
        w = jax.random.uniform(kw, (fan_in, fan_out), jnp.float32, -bound, bound)
        b = jax.random.uniform(kb, (fan_out,), jnp.float32, -bound, bound)
        return w, b

    w1, b1 = lin(ks[0], F, F)
    w2, b2 = lin(ks[1], F, H)
    w3, b3 = lin(ks[2], H, num_classes)

    # Non-trivial BN params so the BN path is actually exercised.
    return dict(
        w1=w1, b1=b1, w2=w2, b2=b2, w3=w3, b3=b3,
        bn1_gamma=1.0 + 0.1 * jax.random.normal(ks[3], (F,), jnp.float32),
        bn1_beta=0.1 * jax.random.normal(ks[4], (F,), jnp.float32),
        bn1_mean=0.05 * jax.random.normal(ks[5], (F,), jnp.float32),
        bn1_var=jnp.abs(1.0 + 0.1 * jax.random.normal(ks[6], (F,), jnp.float32)),
        bn2_gamma=1.0 + 0.1 * jax.random.normal(ks[7], (H,), jnp.float32),
        bn2_beta=jnp.linspace(-0.1, 0.1, H, dtype=jnp.float32),
        bn2_mean=jnp.linspace(-0.05, 0.05, H, dtype=jnp.float32),
        bn2_var=jnp.linspace(0.9, 1.1, H, dtype=jnp.float32),
    )


def reference_forward(x, params):
    """Plain-JAX f32 reference (eval-mode PyTorch semantics)."""
    eps = 1e-5
    h = x @ params["w1"] + params["b1"]
    h = (h - params["bn1_mean"]) / jnp.sqrt(params["bn1_var"] + eps)
    h = h * params["bn1_gamma"] + params["bn1_beta"]
    h = jnp.maximum(h, 0.0)
    h = h @ params["w2"] + params["b2"]
    h = (h - params["bn2_mean"]) / jnp.sqrt(params["bn2_var"] + eps)
    h = h * params["bn2_gamma"] + params["bn2_beta"]
    h = jnp.maximum(h, 0.0)
    return h @ params["w3"] + params["b3"]


if __name__ == "__main__":
    key = jax.random.PRNGKey(0)
    k_x, k_p = jax.random.split(key)

    # Small shapes: batch=20 (not a tile multiple -> exercises padding),
    # num_features=32, num_classes=3. Tile logic picks tb=16 -> 2 grid steps.
    B, F, C = 20, 32, 3
    x = jax.random.normal(k_x, (B, F), jnp.float32)
    params = make_params(k_p, F, C)

    folded = fold_params(params)  # one-time parameter glue, out of the hot path
    out = jax.block_until_ready(predictor_forward(x, folded))
    ref = reference_forward(x, params)

    assert out.shape == (B, C), out.shape
    max_err = float(jnp.max(jnp.abs(out - ref)))
    # bf16 inputs/weights/output with f32 accumulation -> loosened tolerance.
    assert max_err < 5e-2, f"max abs err {max_err}"

    print("KERNEL_OK")
</pallas_src>

<mosaic_0001>
module attributes {stable_mosaic.version = 11 : i64} {
  func.func @predictor_kernel(%arg0: i32, %arg1: memref<16x32xbf16, #tpu.memory_space<vmem>>, %arg2: memref<32x128xbf16, #tpu.memory_space<vmem>>, %arg3: memref<1x128xf32, #tpu.memory_space<vmem>>, %arg4: memref<128x128xbf16, #tpu.memory_space<vmem>>, %arg5: memref<1x128xf32, #tpu.memory_space<vmem>>, %arg6: memref<128x128xbf16, #tpu.memory_space<vmem>>, %arg7: memref<1x128xf32, #tpu.memory_space<vmem>>, %arg8: memref<16x128xbf16, #tpu.memory_space<vmem>>) attributes {dimension_semantics = [#tpu.dimension_semantics<parallel>], iteration_bounds = array<i64: 2>, scalar_prefetch = 0 : i64, scratch_operands = 0 : i64, tpu.core_type = #tpu.core_type<tc>, window_params = [{transform_indices = @transform_0, window_bounds = array<i64: 16, 32>}, {pipeline_mode = #tpu.pipeline_mode<synchronous>, transform_indices = @transform_1, window_bounds = array<i64: 32, 128>}, {pipeline_mode = #tpu.pipeline_mode<synchronous>, transform_indices = @transform_2, window_bounds = array<i64: 1, 128>}, {pipeline_mode = #tpu.pipeline_mode<synchronous>, transform_indices = @transform_3, window_bounds = array<i64: 128, 128>}, {pipeline_mode = #tpu.pipeline_mode<synchronous>, transform_indices = @transform_4, window_bounds = array<i64: 1, 128>}, {pipeline_mode = #tpu.pipeline_mode<synchronous>, transform_indices = @transform_5, window_bounds = array<i64: 128, 128>}, {pipeline_mode = #tpu.pipeline_mode<synchronous>, transform_indices = @transform_6, window_bounds = array<i64: 1, 128>}, {transform_indices = @transform_7, window_bounds = array<i64: 16, 128>}]} {
    %c0 = arith.constant 0 : index
    %c0_0 = arith.constant 0 : index
    %0 = vector.load %arg1[%c0, %c0_0] : memref<16x32xbf16, #tpu.memory_space<vmem>>, vector<16x32xbf16>
    %c0_1 = arith.constant 0 : index
    %c0_2 = arith.constant 0 : index
    %1 = vector.load %arg2[%c0_1, %c0_2] : memref<32x128xbf16, #tpu.memory_space<vmem>>, vector<32x128xbf16>
    %cst = arith.constant dense<0.000000e+00> : vector<16x128xf32>
    %2 = tpu.matmul %0, %1, %cst {dimension_numbers = #tpu.dot_dimension_numbers<[1], [0], [0], [1], [0, 0, 1, 1], [], []>} : vector<16x32xbf16>, vector<32x128xbf16>, vector<16x128xf32> -> vector<16x128xf32>
    %c0_3 = arith.constant 0 : index
    %c0_4 = arith.constant 0 : index
    %3 = vector.load %arg3[%c0_3, %c0_4] : memref<1x128xf32, #tpu.memory_space<vmem>>, vector<1x128xf32>
    %4 = vector.broadcast %3 : vector<1x128xf32> to vector<16x128xf32>
    %5 = arith.addf %2, %4 : vector<16x128xf32>
    %cst_5 = arith.constant 0.000000e+00 : f32
    %6 = vector.broadcast %cst_5 : f32 to vector<16x128xf32>
    %7 = arith.maximumf %5, %6 : vector<16x128xf32>
    %8 = arith.truncf %7 : vector<16x128xf32> to vector<16x128xbf16>
    %c0_6 = arith.constant 0 : index
    %c0_7 = arith.constant 0 : index
    %9 = vector.load %arg4[%c0_6, %c0_7] : memref<128x128xbf16, #tpu.memory_space<vmem>>, vector<128x128xbf16>
    %cst_8 = arith.constant dense<0.000000e+00> : vector<16x128xf32>
    %10 = tpu.matmul %8, %9, %cst_8 {dimension_numbers = #tpu.dot_dimension_numbers<[1], [0], [0], [1], [0, 0, 1, 1], [], []>} : vector<16x128xbf16>, vector<128x128xbf16>, vector<16x128xf32> -> vector<16x128xf32>
    %c0_9 = arith.constant 0 : index
    %c0_10 = arith.constant 0 : index
    %11 = vector.load %arg5[%c0_9, %c0_10] : memref<1x128xf32, #tpu.memory_space<vmem>>, vector<1x128xf32>
    %12 = vector.broadcast %11 : vector<1x128xf32> to vector<16x128xf32>
    %13 = arith.addf %10, %12 : vector<16x128xf32>
    %cst_11 = arith.constant 0.000000e+00 : f32
    %14 = vector.broadcast %cst_11 : f32 to vector<16x128xf32>
    %15 = arith.maximumf %13, %14 : vector<16x128xf32>
    %16 = arith.truncf %15 : vector<16x128xf32> to vector<16x128xbf16>
    %c0_12 = arith.constant 0 : index
    %c0_13 = arith.constant 0 : index
    %17 = vector.load %arg6[%c0_12, %c0_13] : memref<128x128xbf16, #tpu.memory_space<vmem>>, vector<128x128xbf16>
    %cst_14 = arith.constant dense<0.000000e+00> : vector<16x128xf32>
    %18 = tpu.matmul %16, %17, %cst_14 {dimension_numbers = #tpu.dot_dimension_numbers<[1], [0], [0], [1], [0, 0, 1, 1], [], []>} : vector<16x128xbf16>, vector<128x128xbf16>, vector<16x128xf32> -> vector<16x128xf32>
    %c0_15 = arith.constant 0 : index
    %c0_16 = arith.constant 0 : index
    %19 = vector.load %arg7[%c0_15, %c0_16] : memref<1x128xf32, #tpu.memory_space<vmem>>, vector<1x128xf32>
    %20 = vector.broadcast %19 : vector<1x128xf32> to vector<16x128xf32>
    %21 = arith.addf %18, %20 : vector<16x128xf32>
    %22 = arith.truncf %21 : vector<16x128xf32> to vector<16x128xbf16>
    %c0_17 = arith.constant 0 : index
    %c0_18 = arith.constant 0 : index
    %23 = vector.load %arg8[%c0_17, %c0_18] : memref<16x128xbf16, #tpu.memory_space<vmem>>, vector<16x128xbf16>
    tpu.vector_store %arg8[%c0_17, %c0_18], %22 {strides = array<i32>} : memref<16x128xbf16, #tpu.memory_space<vmem>>, vector<16x128xbf16>,
    return
  }
  func.func @transform_0(%arg0: i32) -> (i32, i32) {
    %c0_i32 = arith.constant 0 : i32
    %c0_i32_0 = arith.constant 0 : i32
    return %arg0, %c0_i32 : i32, i32
  }
  func.func @transform_1(%arg0: i32) -> (i32, i32) {
    %c0_i32 = arith.constant 0 : i32
    %c0_i32_0 = arith.constant 0 : i32
    %c0_i32_1 = arith.constant 0 : i32
    return %c0_i32, %c0_i32_0 : i32, i32
  }
  func.func @transform_2(%arg0: i32) -> (i32, i32) {
    %c0_i32 = arith.constant 0 : i32
    %c0_i32_0 = arith.constant 0 : i32
    %c0_i32_1 = arith.constant 0 : i32
    return %c0_i32, %c0_i32_0 : i32, i32
  }
  func.func @transform_3(%arg0: i32) -> (i32, i32) {
    %c0_i32 = arith.constant 0 : i32
    %c0_i32_0 = arith.constant 0 : i32
    %c0_i32_1 = arith.constant 0 : i32
    return %c0_i32, %c0_i32_0 : i32, i32
  }
  func.func @transform_4(%arg0: i32) -> (i32, i32) {
    %c0_i32 = arith.constant 0 : i32
    %c0_i32_0 = arith.constant 0 : i32
    %c0_i32_1 = arith.constant 0 : i32
    return %c0_i32, %c0_i32_0 : i32, i32
  }
  func.func @transform_5(%arg0: i32) -> (i32, i32) {
    %c0_i32 = arith.constant 0 : i32
    %c0_i32_0 = arith.constant 0 : i32
    %c0_i32_1 = arith.constant 0 : i32
    return %c0_i32, %c0_i32_0 : i32, i32
  }
  func.func @transform_6(%arg0: i32) -> (i32, i32) {
    %c0_i32 = arith.constant 0 : i32
    %c0_i32_0 = arith.constant 0 : i32
    %c0_i32_1 = arith.constant 0 : i32
    return %c0_i32, %c0_i32_0 : i32, i32
  }
  func.func @transform_7(%arg0: i32) -> (i32, i32) {
    %c0_i32 = arith.constant 0 : i32
    %c0_i32_0 = arith.constant 0 : i32
    return %arg0, %c0_i32 : i32, i32
  }
}

module attributes {stable_mosaic.version = 11 : i64} {
  func.func @predictor_kernel(%arg0: i32, %arg1: memref<16x32xbf16, #tpu.memory_space<vmem>>, %arg2: memref<32x128xbf16, #tpu.memory_space<vmem>>, %arg3: memref<1x128xf32, #tpu.memory_space<vmem>>, %arg4: memref<128x128xbf16, #tpu.memory_space<vmem>>, %arg5: memref<1x128xf32, #tpu.memory_space<vmem>>, %arg6: memref<128x128xbf16, #tpu.memory_space<vmem>>, %arg7: memref<1x128xf32, #tpu.memory_space<vmem>>, %arg8: memref<16x128xbf16, #tpu.memory_space<vmem>>) attributes {dimension_semantics = [#tpu.dimension_semantics<parallel>], iteration_bounds = array<i64: 2>, scalar_prefetch = 0 : i64, scratch_operands = 0 : i64, tpu.core_type = #tpu.core_type<tc>, window_params = [{transform_indices = @transform_0, window_bounds = array<i64: 16, 32>}, {pipeline_mode = #tpu.pipeline_mode<synchronous>, transform_indices = @transform_1, window_bounds = array<i64: 32, 128>}, {pipeline_mode = #tpu.pipeline_mode<synchronous>, transform_indices = @transform_2, window_bounds = array<i64: 1, 128>}, {pipeline_mode = #tpu.pipeline_mode<synchronous>, transform_indices = @transform_3, window_bounds = array<i64: 128, 128>}, {pipeline_mode = #tpu.pipeline_mode<synchronous>, transform_indices = @transform_4, window_bounds = array<i64: 1, 128>}, {pipeline_mode = #tpu.pipeline_mode<synchronous>, transform_indices = @transform_5, window_bounds = array<i64: 128, 128>}, {pipeline_mode = #tpu.pipeline_mode<synchronous>, transform_indices = @transform_6, window_bounds = array<i64: 1, 128>}, {transform_indices = @transform_7, window_bounds = array<i64: 16, 128>}]} {
    %c0 = arith.constant 0 : index
    %c0_0 = arith.constant 0 : index
    %0 = vector.load %arg1[%c0, %c0_0] : memref<16x32xbf16, #tpu.memory_space<vmem>>, vector<16x32xbf16>
    %c0_1 = arith.constant 0 : index
    %c0_2 = arith.constant 0 : index
    %1 = vector.load %arg2[%c0_1, %c0_2] : memref<32x128xbf16, #tpu.memory_space<vmem>>, vector<32x128xbf16>
    %cst = arith.constant dense<0.000000e+00> : vector<16x128xf32>
    %2 = tpu.matmul %0, %1, %cst {dimension_numbers = #tpu.dot_dimension_numbers<[1], [0], [0], [1], [0, 0, 1, 1], [], []>} : vector<16x32xbf16>, vector<32x128xbf16>, vector<16x128xf32> -> vector<16x128xf32>
    %c0_3 = arith.constant 0 : index
    %c0_4 = arith.constant 0 : index
    %3 = vector.load %arg3[%c0_3, %c0_4] : memref<1x128xf32, #tpu.memory_space<vmem>>, vector<1x128xf32>
    %4 = vector.broadcast %3 : vector<1x128xf32> to vector<16x128xf32>
    %5 = arith.addf %2, %4 : vector<16x128xf32>
    %cst_5 = arith.constant 0.000000e+00 : f32
    %6 = vector.broadcast %cst_5 : f32 to vector<16x128xf32>
    %7 = arith.maximumf %5, %6 : vector<16x128xf32>
    %8 = arith.truncf %7 : vector<16x128xf32> to vector<16x128xbf16>
    %c0_6 = arith.constant 0 : index
    %c0_7 = arith.constant 0 : index
    %9 = vector.load %arg4[%c0_6, %c0_7] : memref<128x128xbf16, #tpu.memory_space<vmem>>, vector<128x128xbf16>
    %cst_8 = arith.constant dense<0.000000e+00> : vector<16x128xf32>
    %10 = tpu.matmul %8, %9, %cst_8 {dimension_numbers = #tpu.dot_dimension_numbers<[1], [0], [0], [1], [0, 0, 1, 1], [], []>} : vector<16x128xbf16>, vector<128x128xbf16>, vector<16x128xf32> -> vector<16x128xf32>
    %c0_9 = arith.constant 0 : index
    %c0_10 = arith.constant 0 : index
    %11 = vector.load %arg5[%c0_9, %c0_10] : memref<1x128xf32, #tpu.memory_space<vmem>>, vector<1x128xf32>
    %12 = vector.broadcast %11 : vector<1x128xf32> to vector<16x128xf32>
    %13 = arith.addf %10, %12 : vector<16x128xf32>
    %cst_11 = arith.constant 0.000000e+00 : f32
    %14 = vector.broadcast %cst_11 : f32 to vector<16x128xf32>
    %15 = arith.maximumf %13, %14 : vector<16x128xf32>
    %16 = arith.truncf %15 : vector<16x128xf32> to vector<16x128xbf16>
    %c0_12 = arith.constant 0 : index
    %c0_13 = arith.constant 0 : index
    %17 = vector.load %arg6[%c0_12, %c0_13] : memref<128x128xbf16, #tpu.memory_space<vmem>>, vector<128x128xbf16>
    %cst_14 = arith.constant dense<0.000000e+00> : vector<16x128xf32>
    %18 = tpu.matmul %16, %17, %cst_14 {dimension_numbers = #tpu.dot_dimension_numbers<[1], [0], [0], [1], [0, 0, 1, 1], [], []>} : vector<16x128xbf16>, vector<128x128xbf16>, vector<16x128xf32> -> vector<16x128xf32>
    %c0_15 = arith.constant 0 : index
    %c0_16 = arith.constant 0 : index
    %19 = vector.load %arg7[%c0_15, %c0_16] : memref<1x128xf32, #tpu.memory_space<vmem>>, vector<1x128xf32>
    %20 = vector.broadcast %19 : vector<1x128xf32> to vector<16x128xf32>
    %21 = arith.addf %18, %20 : vector<16x128xf32>
    %22 = arith.truncf %21 : vector<16x128xf32> to vector<16x128xbf16>
    %c0_17 = arith.constant 0 : index
    %c0_18 = arith.constant 0 : index
    %23 = vector.load %arg8[%c0_17, %c0_18] : memref<16x128xbf16, #tpu.memory_space<vmem>>, vector<16x128xbf16>
    tpu.vector_store %arg8[%c0_17, %c0_18], %22 {strides = array<i32>} : memref<16x128xbf16, #tpu.memory_space<vmem>>, vector<16x128xbf16>,
    return
  }
  func.func @transform_0(%arg0: i32) -> (i32, i32) {
    %c0_i32 = arith.constant 0 : i32
    %c0_i32_0 = arith.constant 0 : i32
    return %arg0, %c0_i32 : i32, i32
  }
  func.func @transform_1(%arg0: i32) -> (i32, i32) {
    %c0_i32 = arith.constant 0 : i32
    %c0_i32_0 = arith.constant 0 : i32
    %c0_i32_1 = arith.constant 0 : i32
    return %c0_i32, %c0_i32_0 : i32, i32
  }
  func.func @transform_2(%arg0: i32) -> (i32, i32) {
    %c0_i32 = arith.constant 0 : i32
    %c0_i32_0 = arith.constant 0 : i32
    %c0_i32_1 = arith.constant 0 : i32
    return %c0_i32, %c0_i32_0 : i32, i32
  }
  func.func @transform_3(%arg0: i32) -> (i32, i32) {
    %c0_i32 = arith.constant 0 : i32
    %c0_i32_0 = arith.constant 0 : i32
    %c0_i32_1 = arith.constant 0 : i32
    return %c0_i32, %c0_i32_0 : i32, i32
  }
  func.func @transform_4(%arg0: i32) -> (i32, i32) {
    %c0_i32 = arith.constant 0 : i32
    %c0_i32_0 = arith.constant 0 : i32
    %c0_i32_1 = arith.constant 0 : i32
    return %c0_i32, %c0_i32_0 : i32, i32
  }
  func.func @transform_5(%arg0: i32) -> (i32, i32) {
    %c0_i32 = arith.constant 0 : i32
    %c0_i32_0 = arith.constant 0 : i32
    %c0_i32_1 = arith.constant 0 : i32
    return %c0_i32, %c0_i32_0 : i32, i32
  }
  func.func @transform_6(%arg0: i32) -> (i32, i32) {
    %c0_i32 = arith.constant 0 : i32
    %c0_i32_0 = arith.constant 0 : i32
    %c0_i32_1 = arith.constant 0 : i32
    return %c0_i32, %c0_i32_0 : i32, i32
  }
  func.func @transform_7(%arg0: i32) -> (i32, i32) {
    %c0_i32 = arith.constant 0 : i32
    %c0_i32_0 = arith.constant 0 : i32
    return %arg0, %c0_i32 : i32, i32
  }
}

</mosaic_0001>

<llo_original>
// kernel: tpu_custom_call.1
$region0: #{tpu_custom_call.1}
  #allocation0 [shape = 'u32[]', space=smem, size = 0x4, offset = 0x4, fixed_abs, tag = 'smem constant byte address 0x4 - core index']
  #allocation1 [shape = 'u32[72,128]{1,0:T(1,128)}', space=vmem, size = 0x9000, scoped, tag = 'internal scratch']
  %s0 = inlined_call_operand.hbm [shape: bf16[32,32], index: 0, kind: input, shape index: {}]
  %s1 = inlined_call_operand.hbm [shape: bf16[32,128], index: 1, kind: input, shape index: {}]
  %s2 = inlined_call_operand.vmem [shape: f32[1,128], index: 2, kind: input, shape index: {}]
  %s3 = inlined_call_operand.hbm [shape: bf16[128,128], index: 3, kind: input, shape index: {}]
  %s4 = inlined_call_operand.vmem [shape: f32[1,128], index: 4, kind: input, shape index: {}]
  %s5 = inlined_call_operand.hbm [shape: bf16[128,128], index: 5, kind: input, shape index: {}]
  %s6 = inlined_call_operand.vmem [shape: f32[1,128], index: 6, kind: input, shape index: {}]
  %s7 = inlined_call_operand.hbm [shape: bf16[32,128], index: 7, kind: output, shape index: {}]
  %s8 = sld [smem:[#allocation0]]
  $region77: #{tpu_custom_call.1} parent=0
    _
  %s10 = ssub.s32 1, %s8
  %s11 = scalar_select 0, %s10, %s8
  $region1: #{tpu_custom_call.1} parent=0
    #allocation2 [shape = 'u8[8192]{0}', space=vmem, size = 0x2000, scoped, tag = 'input window, operand 0']
    #allocation3 [shape = 's32[2]{0}', space=sflag, size = 0x8, scoped, tag = 'scoped memory for tpu_custom_call.1']
    #allocation4 [shape = 's32[2]{0}', space=sflag, size = 0x8, scoped, tag = 'scoped memory for tpu_custom_call.1']
    #allocation5 [shape = 'u8[8192]{0}', space=vmem, size = 0x2000, scoped, tag = 'input window, operand 1, single buffered']
    #allocation6 [shape = 's32[1]{0}', space=sflag, size = 0x4, scoped, tag = 'scoped memory for tpu_custom_call.1']
    #allocation7 [shape = 'u8[32768]{0}', space=vmem, size = 0x8000, scoped, tag = 'input window, operand 3, single buffered']
    #allocation8 [shape = 'u8[32768]{0}', space=vmem, size = 0x8000, scoped, tag = 'input window, operand 5, single buffered']
    #allocation9 [shape = 's32[1]{0}', space=sflag, size = 0x4, scoped, tag = 'scoped memory for tpu_custom_call.1']
    #allocation10 [shape = 'u8[8192]{0}', space=vmem, size = 0x2000, scoped, tag = 'output window, operand 0']
    %12 = vsyncpa [#allocation3], 0
    %s13 = scalar_lea.sflag [#allocation3], 1
    %14 = vsyncpa %s13, 0
    %15 = vsyncpa [#allocation6], 0
    %16 = vsyncpa [#allocation9], 0
    %17 = vsyncpa [#allocation4], 0
    %s18 = scalar_lea.sflag [#allocation4], 1
    %19 = vsyncpa %s18, 0
    loop: start=0, step=1, limit=4
    $region2: #{tpu_custom_call.1} parent=1 // loop_pre_header
      _
    $region3: #{tpu_custom_call.1} parent=1 // loop_header
      %s21 = sphi 0, %s25
      %p22 = scmp.ge.s32.totalorder %s21, 4
      %s31 = sphi 0, %s33
      %s34 = sphi 0, %s31
      %s35 = sphi 0, %s34
      %s51 = sphi 0, %s35
      %s55 = sphi 0, %s55
      %s57 = sphi 0, %s55
      %s58 = sphi 0, %s57
      %s72 = sphi 0, %s58
      %s76 = sphi 0, %s76
      %s78 = sphi 0, %s76
      %s79 = sphi 0, %s78
      %s93 = sphi 0, %s79
      %s97 = sphi 0, %s97
      %s99 = sphi 0, %s97
      %s100 = sphi 0, %s99
      %s114 = sphi 0, %s100
      %s118 = sphi 0, %s118
      %s120 = sphi 0, %s118
      %s121 = sphi 0, %s120
      %s135 = sphi 0, %s121
      %s139 = sphi 0, %s139
      %s141 = sphi 0, %s139
      %s142 = sphi 0, %s141
      %s156 = sphi 0, %s142
      %s160 = sphi 0, %s160
      %s162 = sphi 0, %s160
      %s163 = sphi 0, %s162
      %s177 = sphi 0, %s163
      %s183 = sphi 0, %s185
      %s186 = sphi 0, %s183
      %s187 = sphi 0, %s186
      %s203 = sphi 0, %s187
    $region4: #{tpu_custom_call.1} parent=1 // loop_header_branch
      %24 = sbr.rel (%p22) target = $region8
    $region5: #{tpu_custom_call.1} parent=1 // loop_body
      %s26 = ssub.s32 %s21, 1
      %s27 = ssub.s32 %s21, 2
      %s28 = sadd.s32 %s21, 1
      %s29 = ssub.s32 %s21, %s28
      %p30 = scmp.eq.s32.totalorder %s29, 0
      %s32 = sadd.s32 %s31, 1
      %s33 = scalar_select %p30, %s31, %s32
      %p36 = pneg %p30
      %p37 = scmp.eq.s32.totalorder %s21, 1
      %p38 = por %p36, %p37
      %p39 = scmp.ne.s32.totalorder %s31, %s34
      %p40 = scmp.eq.s32.totalorder %s21, 0
      %p41 = por %p39, %p40
      %p42 = scmp.ne.s32.totalorder %s31, %s34
      %p43 = scmp.eq.s32.totalorder %s26, 1
      %p44 = por %p42, %p43
      %p45 = scmp.ne.s32.totalorder %s34, %s35
      %p46 = scmp.eq.s32.totalorder %s26, 0
      %p47 = por %p45, %p46
      %p48 = scmp.ne.s32.totalorder %s34, %s35
      %p49 = scmp.eq.s32.totalorder %s27, 1
      %p50 = por %p48, %p49
      %p52 = scmp.ne.s32.totalorder %s35, %s51
      %p53 = scmp.eq.s32.totalorder %s27, 0
      %p54 = por %p52, %p53
      %s56 = sadd.s32 %s55, 1
      %p59 = scmp.eq.s32.totalorder %s21, 1
      %p60 = scmp.ne.s32.totalorder %s55, %s57
      %p61 = scmp.eq.s32.totalorder %s21, 0
      %p62 = por %p60, %p61
      %p63 = scmp.ne.s32.totalorder %s55, %s57
      %p64 = scmp.eq.s32.totalorder %s26, 1
      %p65 = por %p63, %p64
      %p66 = scmp.ne.s32.totalorder %s57, %s58
      %p67 = scmp.eq.s32.totalorder %s26, 0
      %p68 = por %p66, %p67
      %p69 = scmp.ne.s32.totalorder %s57, %s58
      %p70 = scmp.eq.s32.totalorder %s27, 1
      %p71 = por %p69, %p70
      %p73 = scmp.ne.s32.totalorder %s58, %s72
      %p74 = scmp.eq.s32.totalorder %s27, 0
      %p75 = por %p73, %p74
      %s77 = sadd.s32 %s76, 1
      %p80 = scmp.eq.s32.totalorder %s21, 1
      %p81 = scmp.ne.s32.totalorder %s76, %s78
      %p82 = scmp.eq.s32.totalorder %s21, 0
      %p83 = por %p81, %p82
      %p84 = scmp.ne.s32.totalorder %s76, %s78
      %p85 = scmp.eq.s32.totalorder %s26, 1
      %p86 = por %p84, %p85
      %p87 = scmp.ne.s32.totalorder %s78, %s79
      %p88 = scmp.eq.s32.totalorder %s26, 0
      %p89 = por %p87, %p88
      %p90 = scmp.ne.s32.totalorder %s78, %s79
      %p91 = scmp.eq.s32.totalorder %s27, 1
      %p92 = por %p90, %p91
      %p94 = scmp.ne.s32.totalorder %s79, %s93
      %p95 = scmp.eq.s32.totalorder %s27, 0
      %p96 = por %p94, %p95
      %s98 = sadd.s32 %s97, 1
      %p101 = scmp.eq.s32.totalorder %s21, 1
      %p102 = scmp.ne.s32.totalorder %s97, %s99
      %p103 = scmp.eq.s32.totalorder %s21, 0
      %p104 = por %p102, %p103
      %p105 = scmp.ne.s32.totalorder %s97, %s99
      %p106 = scmp.eq.s32.totalorder %s26, 1
      %p107 = por %p105, %p106
      %p108 = scmp.ne.s32.totalorder %s99, %s100
      %p109 = scmp.eq.s32.totalorder %s26, 0
      %p110 = por %p108, %p109
      %p111 = scmp.ne.s32.totalorder %s99, %s100
      %p112 = scmp.eq.s32.totalorder %s27, 1
      %p113 = por %p111, %p112
      %p115 = scmp.ne.s32.totalorder %s100, %s114
      %p116 = scmp.eq.s32.totalorder %s27, 0
      %p117 = por %p115, %p116
      %s119 = sadd.s32 %s118, 1
      %p122 = scmp.eq.s32.totalorder %s21, 1
      %p123 = scmp.ne.s32.totalorder %s118, %s120
      %p124 = scmp.eq.s32.totalorder %s21, 0
      %p125 = por %p123, %p124
      %p126 = scmp.ne.s32.totalorder %s118, %s120
      %p127 = scmp.eq.s32.totalorder %s26, 1
      %p128 = por %p126, %p127
      %p129 = scmp.ne.s32.totalorder %s120, %s121
      %p130 = scmp.eq.s32.totalorder %s26, 0
      %p131 = por %p129, %p130
      %p132 = scmp.ne.s32.totalorder %s120, %s121
      %p133 = scmp.eq.s32.totalorder %s27, 1
      %p134 = por %p132, %p133
      %p136 = scmp.ne.s32.totalorder %s121, %s135
      %p137 = scmp.eq.s32.totalorder %s27, 0
      %p138 = por %p136, %p137
      %s140 = sadd.s32 %s139, 1
      %p143 = scmp.eq.s32.totalorder %s21, 1
      %p144 = scmp.ne.s32.totalorder %s139, %s141
      %p145 = scmp.eq.s32.totalorder %s21, 0
      %p146 = por %p144, %p145
      %p147 = scmp.ne.s32.totalorder %s139, %s141
      %p148 = scmp.eq.s32.totalorder %s26, 1
      %p149 = por %p147, %p148
      %p150 = scmp.ne.s32.totalorder %s141, %s142
      %p151 = scmp.eq.s32.totalorder %s26, 0
      %p152 = por %p150, %p151
      %p153 = scmp.ne.s32.totalorder %s141, %s142
      %p154 = scmp.eq.s32.totalorder %s27, 1
      %p155 = por %p153, %p154
      %p157 = scmp.ne.s32.totalorder %s142, %s156
      %p158 = scmp.eq.s32.totalorder %s27, 0
      %p159 = por %p157, %p158
      %s161 = sadd.s32 %s160, 1
      %p164 = scmp.eq.s32.totalorder %s21, 1
      %p165 = scmp.ne.s32.totalorder %s160, %s162
      %p166 = scmp.eq.s32.totalorder %s21, 0
      %p167 = por %p165, %p166
      %p168 = scmp.ne.s32.totalorder %s160, %s162
      %p169 = scmp.eq.s32.totalorder %s26, 1
      %p170 = por %p168, %p169
      %p171 = scmp.ne.s32.totalorder %s162, %s163
      %p172 = scmp.eq.s32.totalorder %s26, 0
      %p173 = por %p171, %p172
      %p174 = scmp.ne.s32.totalorder %s162, %s163
      %p175 = scmp.eq.s32.totalorder %s27, 1
      %p176 = por %p174, %p175
      %p178 = scmp.ne.s32.totalorder %s163, %s177
      %p179 = scmp.eq.s32.totalorder %s27, 0
      %p180 = por %p178, %p179
      %s181 = ssub.s32 %s21, %s28
      %p182 = scmp.eq.s32.totalorder %s181, 0
      %s184 = sadd.s32 %s183, 1
      %s185 = scalar_select %p182, %s183, %s184
      %p188 = pneg %p182
      %p189 = scmp.eq.s32.totalorder %s21, 1
      %p190 = por %p188, %p189
      %p191 = scmp.ne.s32.totalorder %s183, %s186
      %p192 = scmp.eq.s32.totalorder %s21, 0
      %p193 = por %p191, %p192
      %p194 = scmp.ne.s32.totalorder %s183, %s186
      %p195 = scmp.eq.s32.totalorder %s26, 1
      %p196 = por %p194, %p195
      %p197 = scmp.ne.s32.totalorder %s186, %s187
      %p198 = scmp.eq.s32.totalorder %s26, 0
      %p199 = por %p197, %p198
      %p200 = scmp.ne.s32.totalorder %s186, %s187
      %p201 = scmp.eq.s32.totalorder %s27, 1
      %p202 = por %p200, %p201
      %p204 = scmp.ne.s32.totalorder %s187, %s203
      %p205 = scmp.eq.s32.totalorder %s27, 0
      %p206 = por %p204, %p205
      %p207 = scmp.le.s32.totalorder 1, %s21
      %p208 = scmp.lt.s32.totalorder %s21, 3
      %p209 = pnand %p207, %p208
      %p210 = pneg %p209
      // Predicated region
      $region9: #{tpu_custom_call.1} parent=5 // pred_check
        _
      $region10: #{tpu_custom_call.1} parent=5 // pred_check_branch
        %212 = sbr.rel (%p209) target = $region12
      $region11: #{tpu_custom_call.1} parent=5 // pred_region
        %s213 = ssub.s32 %s21, 1
        // Predicated region
        $region13: #{tpu_custom_call.1} parent=11 // pred_check
          %p214 = pneg %p68
        $region14: #{tpu_custom_call.1} parent=11 // pred_check_branch
          %216 = sbr.rel (%p214) target = $region16
        $region15: #{tpu_custom_call.1} parent=11 // pred_region
          %218 = vsyncadd [#allocation6], 0
          %s219 = sshll.u32 %s1, 4
          %s220 = int_to_ptr.hbm [resolvable:$true] %s219
          %s221 = sshll.u32 [#allocation5], 4
          %s222 = int_to_ptr.vmem [resolvable:$true] %s221
          %227 = dma.hbm_to_vmem [thread:$0]  %s220, 256, %s222, [#allocation6], 64, 64, 4
        $region16: #{tpu_custom_call.1} parent=11 // pred_fallthru
          _
        // Predicated region
        $region17: #{tpu_custom_call.1} parent=11 // pred_check
          %p228 = pneg %p89
        $region18: #{tpu_custom_call.1} parent=11 // pred_check_branch
          %230 = sbr.rel (%p228) target = $region20
        $region19: #{tpu_custom_call.1} parent=11 // pred_region
          _
        $region20: #{tpu_custom_call.1} parent=11 // pred_fallthru
          _
        // Predicated region
        $region21: #{tpu_custom_call.1} parent=11 // pred_check
          %p231 = pneg %p110
        $region22: #{tpu_custom_call.1} parent=11 // pred_check_branch
          %233 = sbr.rel (%p231) target = $region24
        $region23: #{tpu_custom_call.1} parent=11 // pred_region
          %235 = vsyncadd [#allocation6], 0
          %s236 = sshll.u32 %s3, 4
          %s237 = int_to_ptr.hbm [resolvable:$true] %s236
          %s238 = sshll.u32 [#allocation7], 4
          %s239 = int_to_ptr.vmem [resolvable:$true] %s238
          %244 = dma.hbm_to_vmem [thread:$0]  %s237, 1024, %s239, [#allocation6], 64, 64, 4
        $region24: #{tpu_custom_call.1} parent=11 // pred_fallthru
          _
        // Predicated region
        $region25: #{tpu_custom_call.1} parent=11 // pred_check
          %p245 = pneg %p131
        $region26: #{tpu_custom_call.1} parent=11 // pred_check_branch
          %247 = sbr.rel (%p245) target = $region28
        $region27: #{tpu_custom_call.1} parent=11 // pred_region
          _
        $region28: #{tpu_custom_call.1} parent=11 // pred_fallthru
          _
        // Predicated region
        $region29: #{tpu_custom_call.1} parent=11 // pred_check
          %p248 = pneg %p152
        $region30: #{tpu_custom_call.1} parent=11 // pred_check_branch
          %250 = sbr.rel (%p248) target = $region32
        $region31: #{tpu_custom_call.1} parent=11 // pred_region
          %252 = vsyncadd [#allocation9], 0
          %s253 = sshll.u32 %s5, 4
          %s254 = int_to_ptr.hbm [resolvable:$true] %s253
          %s255 = sshll.u32 [#allocation8], 4
          %s256 = int_to_ptr.vmem [resolvable:$true] %s255
          %261 = dma.hbm_to_vmem [thread:$0]  %s254, 1024, %s256, [#allocation9], 64, 64, 4
        $region32: #{tpu_custom_call.1} parent=11 // pred_fallthru
          _
        // Predicated region
        $region33: #{tpu_custom_call.1} parent=11 // pred_check
          %p262 = pneg %p173
        $region34: #{tpu_custom_call.1} parent=11 // pred_check_branch
          %264 = sbr.rel (%p262) target = $region36
        $region35: #{tpu_custom_call.1} parent=11 // pred_region
          _
        $region36: #{tpu_custom_call.1} parent=11 // pred_fallthru
          _
      $region12: #{tpu_custom_call.1} parent=5 // pred_fallthru
        _
      %p265 = scmp.lt.s32.totalorder %s21, 2
      // Predicated region
      $region37: #{tpu_custom_call.1} parent=5 // pred_check
        %p266 = pneg %p265
      $region38: #{tpu_custom_call.1} parent=5 // pred_check_branch
        %268 = sbr.rel (%p266) target = $region40
      $region39: #{tpu_custom_call.1} parent=5 // pred_region
        // Predicated region
        $region41: #{tpu_custom_call.1} parent=39 // pred_check
          %p269 = pneg %p41
        $region42: #{tpu_custom_call.1} parent=39 // pred_check_branch
          %271 = sbr.rel (%p269) target = $region44
        $region43: #{tpu_custom_call.1} parent=39 // pred_region
          %s272 = sand.u32 %s31, 1
          %s273 = scalar_lea.sflag [#allocation3], %s272
          %s274 = sand.u32 %s31, 1
          %s275 = smul.addr %s274, 8
          %s276 = scalar_lea.vmem [#allocation2], %s275
          %s277 = smul.u32 2, %s21
          %279 = vsyncadd %s273, 0
          %s280 = smul.addr %s277, 4
          %s281 = scalar_lea.hbm %s0, %s280
          %s282 = sshll.u32 %s281, 4
          %s283 = int_to_ptr.hbm [resolvable:$true] %s282
          %s284 = sshll.u32 %s276, 4
          %s285 = int_to_ptr.vmem [resolvable:$true] %s284
          %290 = dma.hbm_to_vmem [thread:$0]  %s283, 128, %s285, %s273, 64, 64, 4
        $region44: #{tpu_custom_call.1} parent=39 // pred_fallthru
          _
      $region40: #{tpu_custom_call.1} parent=5 // pred_fallthru
        _
      %p291 = scmp.le.s32.totalorder 1, %s21
      %p292 = scmp.lt.s32.totalorder %s21, 3
      %p293 = pnand %p291, %p292
      %p294 = pneg %p293
      // Predicated region
      $region45: #{tpu_custom_call.1} parent=5 // pred_check
        _
      $region46: #{tpu_custom_call.1} parent=5 // pred_check_branch
        %296 = sbr.rel (%p293) target = $region48
      $region47: #{tpu_custom_call.1} parent=5 // pred_region
        %s297 = ssub.s32 %s21, 1
        %s298 = sand.u32 %s34, 1
        %s299 = scalar_lea.sflag [#allocation3], %s298
        %s300 = sand.u32 %s34, 1
        %s301 = smul.addr %s300, 8
        %s302 = scalar_lea.vmem [#allocation2], %s301
        // Predicated region
        $region49: #{tpu_custom_call.1} parent=47 // pred_check
          %p303 = pneg %p47
        $region50: #{tpu_custom_call.1} parent=47 // pred_check_branch
          %305 = sbr.rel (%p303) target = $region52
        $region51: #{tpu_custom_call.1} parent=47 // pred_region
          %307 = dma.done %s299, 128
        $region52: #{tpu_custom_call.1} parent=47 // pred_fallthru
          _
        // Predicated region
        $region53: #{tpu_custom_call.1} parent=47 // pred_check
          %p308 = pneg %p68
        $region54: #{tpu_custom_call.1} parent=47 // pred_check_branch
          %310 = sbr.rel (%p308) target = $region56
        $region55: #{tpu_custom_call.1} parent=47 // pred_region
          %312 = dma.done [#allocation6], 256
        $region56: #{tpu_custom_call.1} parent=47 // pred_fallthru
          _
        // Predicated region
        $region57: #{tpu_custom_call.1} parent=47 // pred_check
          %p313 = pneg %p110
        $region58: #{tpu_custom_call.1} parent=47 // pred_check_branch
          %315 = sbr.rel (%p313) target = $region60
        $region59: #{tpu_custom_call.1} parent=47 // pred_region
          %317 = dma.done [#allocation6], 1024
        $region60: #{tpu_custom_call.1} parent=47 // pred_fallthru
          _
        // Predicated region
        $region61: #{tpu_custom_call.1} parent=47 // pred_check
          %p318 = pneg %p152
        $region62: #{tpu_custom_call.1} parent=47 // pred_check_branch
          %320 = sbr.rel (%p318) target = $region64
        $region63: #{tpu_custom_call.1} parent=47 // pred_region
          %322 = dma.done [#allocation9], 1024
        $region64: #{tpu_custom_call.1} parent=47 // pred_fallthru
          _
        %s323 = sand.u32 %s34, 1
        %s324 = scalar_lea.sflag [#allocation3], %s323
        %s325 = sand.u32 %s34, 1
        %s326 = smul.addr %s325, 8
        %s327 = scalar_lea.vmem [#allocation2], %s326
        %p328 = pneg %p47
        %p329 = pneg %p44
        %p330 = pneg %p68
        %p331 = pneg %p65
        %p332 = pneg %p89
        %p333 = pneg %p86
        %p334 = pneg %p110
        %p335 = pneg %p107
        %p336 = pneg %p131
        %p337 = pneg %p128
        %p338 = pneg %p152
        %p339 = pneg %p149
        %p340 = pneg %p173
        %p341 = pneg %p170
        %p342 = pneg %p199
        %p343 = pneg %p196
        %s344 = sand.u32 %s186, 1
        %s345 = scalar_lea.sflag [#allocation4], %s344
        %s346 = sand.u32 %s186, 1
        %s347 = smul.addr %s346, 8
        %s348 = scalar_lea.vmem [#allocation10], %s347
        %s349 = smul.u32 2, %s26
        %s350 = smul.u32 2, %s26
        %v352 = vld [vmem:[%s302] sm:$0xf]
        %v353 = vld [vmem:[%s302 + $0x4] sm:$0xf]
        %v354 = vld [vmem:[#allocation5] sm:$0xf]
        %v355 = vld [vmem:[#allocation5 + $0x4] sm:$0xf]
        %v356 = vld [vmem:[#allocation5 + $0x8] sm:$0xf]
        %v357 = vld [vmem:[#allocation5 + $0xc] sm:$0xf]
        %v358 = vld [vmem:[%s2] sm:$0x1]
        %v360 = vperm.slane %v358, 0
        %v364 = vunpack.c.l.b16 %v352
        %v365 = vunpack.c.l.b16 %v353
        %v366 = vpack.c.b16 %v365, %v364
        %v371 = vunpack.c.l.b16 %v354
        %v372 = vunpack.c.l.b16 %v355
        %v373 = vunpack.c.l.b16 %v356
        %v374 = vunpack.c.l.b16 %v357
        %v375 = vpack.c.b16 %v372, %v371
        %v376 = vpack.c.b16 %v374, %v373
        %vm379 = vcmask 261120
        %v381 = vsel %vm379, %v366, 0
        %383 = vmatpush.bf16.msra.mxu0 0
        %384 = vmatpush.bf16.msra.mxu0 0
        %385 = vmatpush.bf16.msra.mxu0 0
        %386 = vmatpush.bf16.msra.mxu0 0
        %387 = vmatpush.bf16.msra.mxu0 0
        %388 = vmatpush.bf16.msra.mxu0 0
        %389 = vmatpush.bf16.msra.mxu0 %v376
        %390 = vmatpush.bf16.msra.mxu0 %v375
        %391 = vmatmul.bf16.gmra.mxu0 %v381
        %v392 = vpop.f32.mrf.mxu0
        %v393 = vadd.f32 %v360, %v392
        %v394 = vpop.f32.mrf.mxu0
        %v395 = vadd.f32 %v360, %v394
        %396 = vdwg.mxu0
        %v397 = vmax.f32 %v393, 0.0
        %v398 = vmax.f32 %v395, 0.0
        %v399 = vpack.c.bf16 %v398, %v397
        %v400 = vld [vmem:[#allocation7] sm:$0xf]
        %v401 = vld [vmem:[#allocation7 + $0x4] sm:$0xf]
        %v402 = vld [vmem:[#allocation7 + $0x8] sm:$0xf]
        %v403 = vld [vmem:[#allocation7 + $0xc] sm:$0xf]
        %v404 = vld [vmem:[#allocation7 + $0x10] sm:$0xf]
        %v405 = vld [vmem:[#allocation7 + $0x14] sm:$0xf]
        %v406 = vld [vmem:[#allocation7 + $0x18] sm:$0xf]
        %v407 = vld [vmem:[#allocation7 + $0x1c] sm:$0xf]
        %v408 = vld [vmem:[#allocation7 + $0x20] sm:$0xf]
        %v409 = vld [vmem:[#allocation7 + $0x24] sm:$0xf]
        %v410 = vld [vmem:[#allocation7 + $0x28] sm:$0xf]
        %v411 = vld [vmem:[#allocation7 + $0x2c] sm:$0xf]
        %v412 = vld [vmem:[#allocation7 + $0x30] sm:$0xf]
        %v413 = vld [vmem:[#allocation7 + $0x34] sm:$0xf]
        %v414 = vld [vmem:[#allocation7 + $0x38] sm:$0xf]
        %v415 = vld [vmem:[#allocation7 + $0x3c] sm:$0xf]
        %v416 = vld [vmem:[%s4] sm:$0x1]
        %v418 = vperm.slane %v416, 0
        %v436 = vunpack.c.l.b16 %v400
        %v437 = vunpack.c.l.b16 %v401
        %v438 = vunpack.c.l.b16 %v402
        %v439 = vunpack.c.l.b16 %v403
        %v440 = vunpack.c.l.b16 %v404
        %v441 = vunpack.c.l.b16 %v405
        %v442 = vunpack.c.l.b16 %v406
        %v443 = vunpack.c.l.b16 %v407
        %v444 = vunpack.c.l.b16 %v408
        %v445 = vunpack.c.l.b16 %v409
        %v446 = vunpack.c.l.b16 %v410
        %v447 = vunpack.c.l.b16 %v411
        %v448 = vunpack.c.l.b16 %v412
        %v449 = vunpack.c.l.b16 %v413
        %v450 = vunpack.c.l.b16 %v414
        %v451 = vunpack.c.l.b16 %v415
        %v452 = vpack.c.b16 %v437, %v436
        %v453 = vpack.c.b16 %v439, %v438
        %v454 = vpack.c.b16 %v441, %v440
        %v455 = vpack.c.b16 %v443, %v442
        %v456 = vpack.c.b16 %v445, %v444
        %v457 = vpack.c.b16 %v447, %v446
        %v458 = vpack.c.b16 %v449, %v448
        %v459 = vpack.c.b16 %v451, %v450
        %468 = vmatpush.bf16.msra.mxu0 %v459
        %469 = vmatpush.bf16.msra.mxu0 %v458
        %470 = vmatpush.bf16.msra.mxu0 %v457
        %471 = vmatpush.bf16.msra.mxu0 %v456
        %472 = vmatpush.bf16.msra.mxu0 %v455
        %473 = vmatpush.bf16.msra.mxu0 %v454
        %474 = vmatpush.bf16.msra.mxu0 %v453
        %475 = vmatpush.bf16.msra.mxu0 %v452
        %476 = vmatmul.bf16.gmra.mxu0 %v399
        %v477 = vpop.f32.mrf.mxu0
        %v478 = vadd.f32 %v418, %v477
        %v479 = vpop.f32.mrf.mxu0
        %v480 = vadd.f32 %v418, %v479
        %481 = vdwg.mxu0
        %v482 = vmax.f32 %v478, 0.0
        %v483 = vmax.f32 %v480, 0.0
        %v484 = vpack.c.bf16 %v483, %v482
        %v485 = vld [vmem:[#allocation8] sm:$0xf]
        %v486 = vld [vmem:[#allocation8 + $0x4] sm:$0xf]
        %v487 = vld [vmem:[#allocation8 + $0x8] sm:$0xf]
        %v488 = vld [vmem:[#allocation8 + $0xc] sm:$0xf]
        %v489 = vld [vmem:[#allocation8 + $0x10] sm:$0xf]
        %v490 = vld [vmem:[#allocation8 + $0x14] sm:$0xf]
        %v491 = vld [vmem:[#allocation8 + $0x18] sm:$0xf]
        %v492 = vld [vmem:[#allocation8 + $0x1c] sm:$0xf]
        %v493 = vld [vmem:[#allocation8 + $0x20] sm:$0xf]
        %v494 = vld [vmem:[#allocation8 + $0x24] sm:$0xf]
        %v495 = vld [vmem:[#allocation8 + $0x28] sm:$0xf]
        %v496 = vld [vmem:[#allocation8 + $0x2c] sm:$0xf]
        %v497 = vld [vmem:[#allocation8 + $0x30] sm:$0xf]
        %v498 = vld [vmem:[#allocation8 + $0x34] sm:$0xf]
        %v499 = vld [vmem:[#allocation8 + $0x38] sm:$0xf]
        %v500 = vld [vmem:[#allocation8 + $0x3c] sm:$0xf]
        %v501 = vld [vmem:[%s6] sm:$0x1]
        %v503 = vperm.slane %v501, 0
        %v521 = vunpack.c.l.b16 %v485
        %v522 = vunpack.c.l.b16 %v486
        %v523 = vunpack.c.l.b16 %v487
        %v524 = vunpack.c.l.b16 %v488
        %v525 = vunpack.c.l.b16 %v489
        %v526 = vunpack.c.l.b16 %v490
        %v527 = vunpack.c.l.b16 %v491
        %v528 = vunpack.c.l.b16 %v492
        %v529 = vunpack.c.l.b16 %v493
        %v530 = vunpack.c.l.b16 %v494
        %v531 = vunpack.c.l.b16 %v495
        %v532 = vunpack.c.l.b16 %v496
        %v533 = vunpack.c.l.b16 %v497
        %v534 = vunpack.c.l.b16 %v498
        %v535 = vunpack.c.l.b16 %v499
        %v536 = vunpack.c.l.b16 %v500
        %v537 = vpack.c.b16 %v522, %v521
        %v538 = vpack.c.b16 %v524, %v523
        %v539 = vpack.c.b16 %v526, %v525
        %v540 = vpack.c.b16 %v528, %v527
        %v541 = vpack.c.b16 %v530, %v529
        %v542 = vpack.c.b16 %v532, %v531
        %v543 = vpack.c.b16 %v534, %v533
        %v544 = vpack.c.b16 %v536, %v535
        %553 = vmatpush.bf16.msra.mxu0 %v544
        %554 = vmatpush.bf16.msra.mxu0 %v543
        %555 = vmatpush.bf16.msra.mxu0 %v542
        %556 = vmatpush.bf16.msra.mxu0 %v541
        %557 = vmatpush.bf16.msra.mxu0 %v540
        %558 = vmatpush.bf16.msra.mxu0 %v539
        %559 = vmatpush.bf16.msra.mxu0 %v538
        %560 = vmatpush.bf16.msra.mxu0 %v537
        %561 = vmatmul.bf16.gmra.mxu0 %v484
        %v562 = vpop.f32.mrf.mxu0
        %v563 = vadd.f32 %v503, %v562
        %v564 = vpop.f32.mrf.mxu0
        %v565 = vadd.f32 %v503, %v564
        %566 = vdwg.mxu0
        %v567 = vpack.c.bf16 %v563, %v563
        %v568 = vpack.c.bf16 %v565, %v565
        %569 = vst [vmem:[%s348] sm:$0xf] %v567
        %570 = vst [vmem:[%s348 + $0x4] sm:$0xf] %v568
        %s571 = sand.u32 %s186, 1
        %s572 = scalar_lea.sflag [#allocation4], %s571
        %s573 = sand.u32 %s186, 1
        %s574 = smul.addr %s573, 8
        %s575 = scalar_lea.vmem [#allocation10], %s574
        // Predicated region
        $region65: #{tpu_custom_call.1} parent=47 // pred_check
          %p576 = pneg %p196
        $region66: #{tpu_custom_call.1} parent=47 // pred_check_branch
          %578 = sbr.rel (%p576) target = $region68
        $region67: #{tpu_custom_call.1} parent=47 // pred_region
          %s579 = smul.u32 2, %s26
          %581 = vsyncadd %s572, 0
          %s582 = smul.addr %s579, 4
          %s583 = scalar_lea.hbm %s7, %s582
          %s584 = sshll.u32 %s575, 4
          %s585 = int_to_ptr.vmem [resolvable:$true] %s584
          %s586 = sshll.u32 %s583, 4
          %s587 = int_to_ptr.hbm [resolvable:$true] %s586
          %592 = dma.vmem_to_hbm [thread:$0]  %s585, 128, %s587, %s572, 64, 64, 4
        $region68: #{tpu_custom_call.1} parent=47 // pred_fallthru
          _
      $region48: #{tpu_custom_call.1} parent=5 // pred_fallthru
        _
      %p593 = scmp.le.s32.totalorder 2, %s21
      // Predicated region
      $region69: #{tpu_custom_call.1} parent=5 // pred_check
        %p594 = pneg %p593
      $region70: #{tpu_custom_call.1} parent=5 // pred_check_branch
        %596 = sbr.rel (%p594) target = $region72
      $region71: #{tpu_custom_call.1} parent=5 // pred_region
        %s597 = ssub.s32 %s21, 2
        // Predicated region
        $region73: #{tpu_custom_call.1} parent=71 // pred_check
          %p598 = pneg %p202
        $region74: #{tpu_custom_call.1} parent=71 // pred_check_branch
          %600 = sbr.rel (%p598) target = $region76
        $region75: #{tpu_custom_call.1} parent=71 // pred_region
          %s601 = sand.u32 %s187, 1
          %s602 = scalar_lea.sflag [#allocation4], %s601
          %s603 = sand.u32 %s187, 1
          %s604 = smul.addr %s603, 8
          %s605 = scalar_lea.vmem [#allocation10], %s604
          %607 = dma.done %s602, 128
        $region76: #{tpu_custom_call.1} parent=71 // pred_fallthru
          _
      $region72: #{tpu_custom_call.1} parent=5 // pred_fallthru
        _
    $region6: #{tpu_custom_call.1} parent=1 // loop_footer
      %s25 = sadd.s32 1, %s21
    $region7: #{tpu_custom_call.1} parent=1 // loop_footer_branch
      %20 = sbr.rel target = $region3
    $region8: #{tpu_custom_call.1} parent=1 // loop_exit
      _
    %608 = vsyncpa [#allocation3], 1
    %s609 = scalar_lea.sflag [#allocation3], 1
    %610 = vsyncpa %s609, 1
    %611 = vsyncpa [#allocation6], 1
    %612 = vsyncpa [#allocation9], 1
    %613 = vsyncpa [#allocation4], 1
    %s614 = scalar_lea.sflag [#allocation4], 1
    %615 = vsyncpa %s614, 1

// kernel: tpu_custom_call.1
$region0: #{tpu_custom_call.1}
  #allocation0 [shape = 'u32[]', space=smem, size = 0x4, offset = 0x4, fixed_abs, tag = 'smem constant byte address 0x4 - core index']
  #allocation1 [shape = 'u32[72,128]{1,0:T(1,128)}', space=vmem, size = 0x9000, scoped, tag = 'internal scratch']
  %s0 = inlined_call_operand.hbm [shape: bf16[32,32], index: 0, kind: input, shape index: {}]
  %s1 = inlined_call_operand.hbm [shape: bf16[32,128], index: 1, kind: input, shape index: {}]
  %s2 = inlined_call_operand.vmem [shape: f32[1,128], index: 2, kind: input, shape index: {}]
  %s3 = inlined_call_operand.hbm [shape: bf16[128,128], index: 3, kind: input, shape index: {}]
  %s4 = inlined_call_operand.vmem [shape: f32[1,128], index: 4, kind: input, shape index: {}]
  %s5 = inlined_call_operand.hbm [shape: bf16[128,128], index: 5, kind: input, shape index: {}]
  %s6 = inlined_call_operand.vmem [shape: f32[1,128], index: 6, kind: input, shape index: {}]
  %s7 = inlined_call_operand.hbm [shape: bf16[32,128], index: 7, kind: output, shape index: {}]
  %s8 = sld [smem:[#allocation0]]
  $region77: #{tpu_custom_call.1} parent=0
    _
  %s10 = ssub.s32 1, %s8
  %s11 = scalar_select 0, %s10, %s8
  $region1: #{tpu_custom_call.1} parent=0
    #allocation2 [shape = 'u8[8192]{0}', space=vmem, size = 0x2000, scoped, tag = 'input window, operand 0']
    #allocation3 [shape = 's32[2]{0}', space=sflag, size = 0x8, scoped, tag = 'scoped memory for tpu_custom_call.1']
    #allocation4 [shape = 's32[2]{0}', space=sflag, size = 0x8, scoped, tag = 'scoped memory for tpu_custom_call.1']
    #allocation5 [shape = 'u8[8192]{0}', space=vmem, size = 0x2000, scoped, tag = 'input window, operand 1, single buffered']
    #allocation6 [shape = 's32[1]{0}', space=sflag, size = 0x4, scoped, tag = 'scoped memory for tpu_custom_call.1']
    #allocation7 [shape = 'u8[32768]{0}', space=vmem, size = 0x8000, scoped, tag = 'input window, operand 3, single buffered']
    #allocation8 [shape = 'u8[32768]{0}', space=vmem, size = 0x8000, scoped, tag = 'input window, operand 5, single buffered']
    #allocation9 [shape = 's32[1]{0}', space=sflag, size = 0x4, scoped, tag = 'scoped memory for tpu_custom_call.1']
    #allocation10 [shape = 'u8[8192]{0}', space=vmem, size = 0x2000, scoped, tag = 'output window, operand 0']
    %12 = vsyncpa [#allocation3], 0
    %s13 = scalar_lea.sflag [#allocation3], 1
    %14 = vsyncpa %s13, 0
    %15 = vsyncpa [#allocation6], 0
    %16 = vsyncpa [#allocation9], 0
    %17 = vsyncpa [#allocation4], 0
    %s18 = scalar_lea.sflag [#allocation4], 1
    %19 = vsyncpa %s18, 0
    loop: start=0, step=1, limit=4
    $region2: #{tpu_custom_call.1} parent=1 // loop_pre_header
      _
    $region3: #{tpu_custom_call.1} parent=1 // loop_header
      %s21 = sphi 0, %s25
      %p22 = scmp.ge.s32.totalorder %s21, 4
      %s31 = sphi 0, %s33
      %s34 = sphi 0, %s31
      %s35 = sphi 0, %s34
      %s51 = sphi 0, %s35
      %s55 = sphi 0, %s55
      %s57 = sphi 0, %s55
      %s58 = sphi 0, %s57
      %s72 = sphi 0, %s58
      %s76 = sphi 0, %s76
      %s78 = sphi 0, %s76
      %s79 = sphi 0, %s78
      %s93 = sphi 0, %s79
      %s97 = sphi 0, %s97
      %s99 = sphi 0, %s97
      %s100 = sphi 0, %s99
      %s114 = sphi 0, %s100
      %s118 = sphi 0, %s118
      %s120 = sphi 0, %s118
      %s121 = sphi 0, %s120
      %s135 = sphi 0, %s121
      %s139 = sphi 0, %s139
      %s141 = sphi 0, %s139
      %s142 = sphi 0, %s141
      %s156 = sphi 0, %s142
      %s160 = sphi 0, %s160
      %s162 = sphi 0, %s160
      %s163 = sphi 0, %s162
      %s177 = sphi 0, %s163
      %s183 = sphi 0, %s185
      %s186 = sphi 0, %s183
      %s187 = sphi 0, %s186
      %s203 = sphi 0, %s187
    $region4: #{tpu_custom_call.1} parent=1 // loop_header_branch
      %24 = sbr.rel (%p22) target = $region8
    $region5: #{tpu_custom_call.1} parent=1 // loop_body
      %s26 = ssub.s32 %s21, 1
      %s27 = ssub.s32 %s21, 2
      %s28 = sadd.s32 %s21, 1
      %s29 = ssub.s32 %s21, %s28
      %p30 = scmp.eq.s32.totalorder %s29, 0
      %s32 = sadd.s32 %s31, 1
      %s33 = scalar_select %p30, %s31, %s32
      %p36 = pneg %p30
      %p37 = scmp.eq.s32.totalorder %s21, 1
      %p38 = por %p36, %p37
      %p39 = scmp.ne.s32.totalorder %s31, %s34
      %p40 = scmp.eq.s32.totalorder %s21, 0
      %p41 = por %p39, %p40
      %p42 = scmp.ne.s32.totalorder %s31, %s34
      %p43 = scmp.eq.s32.totalorder %s26, 1
      %p44 = por %p42, %p43
      %p45 = scmp.ne.s32.totalorder %s34, %s35
      %p46 = scmp.eq.s32.totalorder %s26, 0
      %p47 = por %p45, %p46
      %p48 = scmp.ne.s32.totalorder %s34, %s35
      %p49 = scmp.eq.s32.totalorder %s27, 1
      %p50 = por %p48, %p49
      %p52 = scmp.ne.s32.totalorder %s35, %s51
      %p53 = scmp.eq.s32.totalorder %s27, 0
      %p54 = por %p52, %p53
      %s56 = sadd.s32 %s55, 1
      %p59 = scmp.eq.s32.totalorder %s21, 1
      %p60 = scmp.ne.s32.totalorder %s55, %s57
      %p61 = scmp.eq.s32.totalorder %s21, 0
      %p62 = por %p60, %p61
      %p63 = scmp.ne.s32.totalorder %s55, %s57
      %p64 = scmp.eq.s32.totalorder %s26, 1
      %p65 = por %p63, %p64
      %p66 = scmp.ne.s32.totalorder %s57, %s58
      %p67 = scmp.eq.s32.totalorder %s26, 0
      %p68 = por %p66, %p67
      %p69 = scmp.ne.s32.totalorder %s57, %s58
      %p70 = scmp.eq.s32.totalorder %s27, 1
      %p71 = por %p69, %p70
      %p73 = scmp.ne.s32.totalorder %s58, %s72
      %p74 = scmp.eq.s32.totalorder %s27, 0
      %p75 = por %p73, %p74
      %s77 = sadd.s32 %s76, 1
      %p80 = scmp.eq.s32.totalorder %s21, 1
      %p81 = scmp.ne.s32.totalorder %s76, %s78
      %p82 = scmp.eq.s32.totalorder %s21, 0
      %p83 = por %p81, %p82
      %p84 = scmp.ne.s32.totalorder %s76, %s78
      %p85 = scmp.eq.s32.totalorder %s26, 1
      %p86 = por %p84, %p85
      %p87 = scmp.ne.s32.totalorder %s78, %s79
      %p88 = scmp.eq.s32.totalorder %s26, 0
      %p89 = por %p87, %p88
      %p90 = scmp.ne.s32.totalorder %s78, %s79
      %p91 = scmp.eq.s32.totalorder %s27, 1
      %p92 = por %p90, %p91
      %p94 = scmp.ne.s32.totalorder %s79, %s93
      %p95 = scmp.eq.s32.totalorder %s27, 0
      %p96 = por %p94, %p95
      %s98 = sadd.s32 %s97, 1
      %p101 = scmp.eq.s32.totalorder %s21, 1
      %p102 = scmp.ne.s32.totalorder %s97, %s99
      %p103 = scmp.eq.s32.totalorder %s21, 0
      %p104 = por %p102, %p103
      %p105 = scmp.ne.s32.totalorder %s97, %s99
      %p106 = scmp.eq.s32.totalorder %s26, 1
      %p107 = por %p105, %p106
      %p108 = scmp.ne.s32.totalorder %s99, %s100
      %p109 = scmp.eq.s32.totalorder %s26, 0
      %p110 = por %p108, %p109
      %p111 = scmp.ne.s32.totalorder %s99, %s100
      %p112 = scmp.eq.s32.totalorder %s27, 1
      %p113 = por %p111, %p112
      %p115 = scmp.ne.s32.totalorder %s100, %s114
      %p116 = scmp.eq.s32.totalorder %s27, 0
      %p117 = por %p115, %p116
      %s119 = sadd.s32 %s118, 1
      %p122 = scmp.eq.s32.totalorder %s21, 1
      %p123 = scmp.ne.s32.totalorder %s118, %s120
      %p124 = scmp.eq.s32.totalorder %s21, 0
      %p125 = por %p123, %p124
      %p126 = scmp.ne.s32.totalorder %s118, %s120
      %p127 = scmp.eq.s32.totalorder %s26, 1
      %p128 = por %p126, %p127
      %p129 = scmp.ne.s32.totalorder %s120, %s121
      %p130 = scmp.eq.s32.totalorder %s26, 0
      %p131 = por %p129, %p130
      %p132 = scmp.ne.s32.totalorder %s120, %s121
      %p133 = scmp.eq.s32.totalorder %s27, 1
      %p134 = por %p132, %p133
      %p136 = scmp.ne.s32.totalorder %s121, %s135
      %p137 = scmp.eq.s32.totalorder %s27, 0
      %p138 = por %p136, %p137
      %s140 = sadd.s32 %s139, 1
      %p143 = scmp.eq.s32.totalorder %s21, 1
      %p144 = scmp.ne.s32.totalorder %s139, %s141
      %p145 = scmp.eq.s32.totalorder %s21, 0
      %p146 = por %p144, %p145
      %p147 = scmp.ne.s32.totalorder %s139, %s141
      %p148 = scmp.eq.s32.totalorder %s26, 1
      %p149 = por %p147, %p148
      %p150 = scmp.ne.s32.totalorder %s141, %s142
      %p151 = scmp.eq.s32.totalorder %s26, 0
      %p152 = por %p150, %p151
      %p153 = scmp.ne.s32.totalorder %s141, %s142
      %p154 = scmp.eq.s32.totalorder %s27, 1
      %p155 = por %p153, %p154
      %p157 = scmp.ne.s32.totalorder %s142, %s156
      %p158 = scmp.eq.s32.totalorder %s27, 0
      %p159 = por %p157, %p158
      %s161 = sadd.s32 %s160, 1
      %p164 = scmp.eq.s32.totalorder %s21, 1
      %p165 = scmp.ne.s32.totalorder %s160, %s162
      %p166 = scmp.eq.s32.totalorder %s21, 0
      %p167 = por %p165, %p166
      %p168 = scmp.ne.s32.totalorder %s160, %s162
      %p169 = scmp.eq.s32.totalorder %s26, 1
      %p170 = por %p168, %p169
      %p171 = scmp.ne.s32.totalorder %s162, %s163
      %p172 = scmp.eq.s32.totalorder %s26, 0
      %p173 = por %p171, %p172
      %p174 = scmp.ne.s32.totalorder %s162, %s163
      %p175 = scmp.eq.s32.totalorder %s27, 1
      %p176 = por %p174, %p175
      %p178 = scmp.ne.s32.totalorder %s163, %s177
      %p179 = scmp.eq.s32.totalorder %s27, 0
      %p180 = por %p178, %p179
      %s181 = ssub.s32 %s21, %s28
      %p182 = scmp.eq.s32.totalorder %s181, 0
      %s184 = sadd.s32 %s183, 1
      %s185 = scalar_select %p182, %s183, %s184
      %p188 = pneg %p182
      %p189 = scmp.eq.s32.totalorder %s21, 1
      %p190 = por %p188, %p189
      %p191 = scmp.ne.s32.totalorder %s183, %s186
      %p192 = scmp.eq.s32.totalorder %s21, 0
      %p193 = por %p191, %p192
      %p194 = scmp.ne.s32.totalorder %s183, %s186
      %p195 = scmp.eq.s32.totalorder %s26, 1
      %p196 = por %p194, %p195
      %p197 = scmp.ne.s32.totalorder %s186, %s187
      %p198 = scmp.eq.s32.totalorder %s26, 0
      %p199 = por %p197, %p198
      %p200 = scmp.ne.s32.totalorder %s186, %s187
      %p201 = scmp.eq.s32.totalorder %s27, 1
      %p202 = por %p200, %p201
      %p204 = scmp.ne.s32.totalorder %s187, %s203
      %p205 = scmp.eq.s32.totalorder %s27, 0
      %p206 = por %p204, %p205
      %p207 = scmp.le.s32.totalorder 1, %s21
      %p208 = scmp.lt.s32.totalorder %s21, 3
      %p209 = pnand %p207, %p208
      %p210 = pneg %p209
      // Predicated region
      $region9: #{tpu_custom_call.1} parent=5 // pred_check
        _
      $region10: #{tpu_custom_call.1} parent=5 // pred_check_branch
        %212 = sbr.rel (%p209) target = $region12
      $region11: #{tpu_custom_call.1} parent=5 // pred_region
        %s213 = ssub.s32 %s21, 1
        // Predicated region
        $region13: #{tpu_custom_call.1} parent=11 // pred_check
          %p214 = pneg %p68
        $region14: #{tpu_custom_call.1} parent=11 // pred_check_branch
          %216 = sbr.rel (%p214) target = $region16
        $region15: #{tpu_custom_call.1} parent=11 // pred_region
          %218 = vsyncadd [#allocation6], 0
          %s219 = sshll.u32 %s1, 4
          %s220 = int_to_ptr.hbm [resolvable:$true] %s219
          %s221 = sshll.u32 [#allocation5], 4
          %s222 = int_to_ptr.vmem [resolvable:$true] %s221
          %227 = dma.hbm_to_vmem [thread:$0]  %s220, 256, %s222, [#allocation6], 64, 64, 4
        $region16: #{tpu_custom_call.1} parent=11 // pred_fallthru
          _
        // Predicated region
        $region17: #{tpu_custom_call.1} parent=11 // pred_check
          %p228 = pneg %p89
        $region18: #{tpu_custom_call.1} parent=11 // pred_check_branch
          %230 = sbr.rel (%p228) target = $region20
        $region19: #{tpu_custom_call.1} parent=11 // pred_region
          _
        $region20: #{tpu_custom_call.1} parent=11 // pred_fallthru
          _
        // Predicated region
        $region21: #{tpu_custom_call.1} parent=11 // pred_check
          %p231 = pneg %p110
        $region22: #{tpu_custom_call.1} parent=11 // pred_check_branch
          %233 = sbr.rel (%p231) target = $region24
        $region23: #{tpu_custom_call.1} parent=11 // pred_region
          %235 = vsyncadd [#allocation6], 0
          %s236 = sshll.u32 %s3, 4
          %s237 = int_to_ptr.hbm [resolvable:$true] %s236
          %s238 = sshll.u32 [#allocation7], 4
          %s239 = int_to_ptr.vmem [resolvable:$true] %s238
          %244 = dma.hbm_to_vmem [thread:$0]  %s237, 1024, %s239, [#allocation6], 64, 64, 4
        $region24: #{tpu_custom_call.1} parent=11 // pred_fallthru
          _
        // Predicated region
        $region25: #{tpu_custom_call.1} parent=11 // pred_check
          %p245 = pneg %p131
        $region26: #{tpu_custom_call.1} parent=11 // pred_check_branch
          %247 = sbr.rel (%p245) target = $region28
        $region27: #{tpu_custom_call.1} parent=11 // pred_region
          _
        $region28: #{tpu_custom_call.1} parent=11 // pred_fallthru
          _
        // Predicated region
        $region29: #{tpu_custom_call.1} parent=11 // pred_check
          %p248 = pneg %p152
        $region30: #{tpu_custom_call.1} parent=11 // pred_check_branch
          %250 = sbr.rel (%p248) target = $region32
        $region31: #{tpu_custom_call.1} parent=11 // pred_region
          %252 = vsyncadd [#allocation9], 0
          %s253 = sshll.u32 %s5, 4
          %s254 = int_to_ptr.hbm [resolvable:$true] %s253
          %s255 = sshll.u32 [#allocation8], 4
          %s256 = int_to_ptr.vmem [resolvable:$true] %s255
          %261 = dma.hbm_to_vmem [thread:$0]  %s254, 1024, %s256, [#allocation9], 64, 64, 4
        $region32: #{tpu_custom_call.1} parent=11 // pred_fallthru
          _
        // Predicated region
        $region33: #{tpu_custom_call.1} parent=11 // pred_check
          %p262 = pneg %p173
        $region34: #{tpu_custom_call.1} parent=11 // pred_check_branch
          %264 = sbr.rel (%p262) target = $region36
        $region35: #{tpu_custom_call.1} parent=11 // pred_region
          _
        $region36: #{tpu_custom_call.1} parent=11 // pred_fallthru
          _
      $region12: #{tpu_custom_call.1} parent=5 // pred_fallthru
        _
      %p265 = scmp.lt.s32.totalorder %s21, 2
      // Predicated region
      $region37: #{tpu_custom_call.1} parent=5 // pred_check
        %p266 = pneg %p265
      $region38: #{tpu_custom_call.1} parent=5 // pred_check_branch
        %268 = sbr.rel (%p266) target = $region40
      $region39: #{tpu_custom_call.1} parent=5 // pred_region
        // Predicated region
        $region41: #{tpu_custom_call.1} parent=39 // pred_check
          %p269 = pneg %p41
        $region42: #{tpu_custom_call.1} parent=39 // pred_check_branch
          %271 = sbr.rel (%p269) target = $region44
        $region43: #{tpu_custom_call.1} parent=39 // pred_region
          %s272 = sand.u32 %s31, 1
          %s273 = scalar_lea.sflag [#allocation3], %s272
          %s274 = sand.u32 %s31, 1
          %s275 = smul.addr %s274, 8
          %s276 = scalar_lea.vmem [#allocation2], %s275
          %s277 = smul.u32 2, %s21
          %279 = vsyncadd %s273, 0
          %s280 = smul.addr %s277, 4
          %s281 = scalar_lea.hbm %s0, %s280
          %s282 = sshll.u32 %s281, 4
          %s283 = int_to_ptr.hbm [resolvable:$true] %s282
          %s284 = sshll.u32 %s276, 4
          %s285 = int_to_ptr.vmem [resolvable:$true] %s284
          %290 = dma.hbm_to_vmem [thread:$0]  %s283, 128, %s285, %s273, 64, 64, 4
        $region44: #{tpu_custom_call.1} parent=39 // pred_fallthru
          _
      $region40: #{tpu_custom_call.1} parent=5 // pred_fallthru
        _
      %p291 = scmp.le.s32.totalorder 1, %s21
      %p292 = scmp.lt.s32.totalorder %s21, 3
      %p293 = pnand %p291, %p292
      %p294 = pneg %p293
      // Predicated region
      $region45: #{tpu_custom_call.1} parent=5 // pred_check
        _
      $region46: #{tpu_custom_call.1} parent=5 // pred_check_branch
        %296 = sbr.rel (%p293) target = $region48
      $region47: #{tpu_custom_call.1} parent=5 // pred_region
        %s297 = ssub.s32 %s21, 1
        %s298 = sand.u32 %s34, 1
        %s299 = scalar_lea.sflag [#allocation3], %s298
        %s300 = sand.u32 %s34, 1
        %s301 = smul.addr %s300, 8
        %s302 = scalar_lea.vmem [#allocation2], %s301
        // Predicated region
        $region49: #{tpu_custom_call.1} parent=47 // pred_check
          %p303 = pneg %p47
        $region50: #{tpu_custom_call.1} parent=47 // pred_check_branch
          %305 = sbr.rel (%p303) target = $region52
        $region51: #{tpu_custom_call.1} parent=47 // pred_region
          %307 = dma.done %s299, 128
        $region52: #{tpu_custom_call.1} parent=47 // pred_fallthru
          _
        // Predicated region
        $region53: #{tpu_custom_call.1} parent=47 // pred_check
          %p308 = pneg %p68
        $region54: #{tpu_custom_call.1} parent=47 // pred_check_branch
          %310 = sbr.rel (%p308) target = $region56
        $region55: #{tpu_custom_call.1} parent=47 // pred_region
          %312 = dma.done [#allocation6], 256
        $region56: #{tpu_custom_call.1} parent=47 // pred_fallthru
          _
        // Predicated region
        $region57: #{tpu_custom_call.1} parent=47 // pred_check
          %p313 = pneg %p110
        $region58: #{tpu_custom_call.1} parent=47 // pred_check_branch
          %315 = sbr.rel (%p313) target = $region60
        $region59: #{tpu_custom_call.1} parent=47 // pred_region
          %317 = dma.done [#allocation6], 1024
        $region60: #{tpu_custom_call.1} parent=47 // pred_fallthru
          _
        // Predicated region
        $region61: #{tpu_custom_call.1} parent=47 // pred_check
          %p318 = pneg %p152
        $region62: #{tpu_custom_call.1} parent=47 // pred_check_branch
          %320 = sbr.rel (%p318) target = $region64
        $region63: #{tpu_custom_call.1} parent=47 // pred_region
          %322 = dma.done [#allocation9], 1024
        $region64: #{tpu_custom_call.1} parent=47 // pred_fallthru
          _
        %s323 = sand.u32 %s34, 1
        %s324 = scalar_lea.sflag [#allocation3], %s323
        %s325 = sand.u32 %s34, 1
        %s326 = smul.addr %s325, 8
        %s327 = scalar_lea.vmem [#allocation2], %s326
        %p328 = pneg %p47
        %p329 = pneg %p44
        %p330 = pneg %p68
        %p331 = pneg %p65
        %p332 = pneg %p89
        %p333 = pneg %p86
        %p334 = pneg %p110
        %p335 = pneg %p107
        %p336 = pneg %p131
        %p337 = pneg %p128
        %p338 = pneg %p152
        %p339 = pneg %p149
        %p340 = pneg %p173
        %p341 = pneg %p170
        %p342 = pneg %p199
        %p343 = pneg %p196
        %s344 = sand.u32 %s186, 1
        %s345 = scalar_lea.sflag [#allocation4], %s344
        %s346 = sand.u32 %s186, 1
        %s347 = smul.addr %s346, 8
        %s348 = scalar_lea.vmem [#allocation10], %s347
        %s349 = smul.u32 2, %s26
        %s350 = smul.u32 2, %s26
        %v352 = vld [vmem:[%s302] sm:$0xf]
        %v353 = vld [vmem:[%s302 + $0x4] sm:$0xf]
        %v354 = vld [vmem:[#allocation5] sm:$0xf]
        %v355 = vld [vmem:[#allocation5 + $0x4] sm:$0xf]
        %v356 = vld [vmem:[#allocation5 + $0x8] sm:$0xf]
        %v357 = vld [vmem:[#allocation5 + $0xc] sm:$0xf]
        %v358 = vld [vmem:[%s2] sm:$0x1]
        %v360 = vperm.slane %v358, 0
        %v364 = vunpack.c.l.b16 %v352
        %v365 = vunpack.c.l.b16 %v353
        %v366 = vpack.c.b16 %v365, %v364
        %v371 = vunpack.c.l.b16 %v354
        %v372 = vunpack.c.l.b16 %v355
        %v373 = vunpack.c.l.b16 %v356
        %v374 = vunpack.c.l.b16 %v357
        %v375 = vpack.c.b16 %v372, %v371
        %v376 = vpack.c.b16 %v374, %v373
        %vm379 = vcmask 261120
        %v381 = vsel %vm379, %v366, 0
        %383 = vmatpush.bf16.msra.mxu0 0
        %384 = vmatpush.bf16.msra.mxu0 0
        %385 = vmatpush.bf16.msra.mxu0 0
        %386 = vmatpush.bf16.msra.mxu0 0
        %387 = vmatpush.bf16.msra.mxu0 0
        %388 = vmatpush.bf16.msra.mxu0 0
        %389 = vmatpush.bf16.msra.mxu0 %v376
        %390 = vmatpush.bf16.msra.mxu0 %v375
        %391 = vmatmul.bf16.gmra.mxu0 %v381
        %v392 = vpop.f32.mrf.mxu0
        %v393 = vadd.f32 %v360, %v392
        %v394 = vpop.f32.mrf.mxu0
        %v395 = vadd.f32 %v360, %v394
        %396 = vdwg.mxu0
        %v397 = vmax.f32 %v393, 0.0
        %v398 = vmax.f32 %v395, 0.0
        %v399 = vpack.c.bf16 %v398, %v397
        %v400 = vld [vmem:[#allocation7] sm:$0xf]
        %v401 = vld [vmem:[#allocation7 + $0x4] sm:$0xf]
        %v402 = vld [vmem:[#allocation7 + $0x8] sm:$0xf]
        %v403 = vld [vmem:[#allocation7 + $0xc] sm:$0xf]
        %v404 = vld [vmem:[#allocation7 + $0x10] sm:$0xf]
        %v405 = vld [vmem:[#allocation7 + $0x14] sm:$0xf]
        %v406 = vld [vmem:[#allocation7 + $0x18] sm:$0xf]
        %v407 = vld [vmem:[#allocation7 + $0x1c] sm:$0xf]
        %v408 = vld [vmem:[#allocation7 + $0x20] sm:$0xf]
        %v409 = vld [vmem:[#allocation7 + $0x24] sm:$0xf]
        %v410 = vld [vmem:[#allocation7 + $0x28] sm:$0xf]
        %v411 = vld [vmem:[#allocation7 + $0x2c] sm:$0xf]
        %v412 = vld [vmem:[#allocation7 + $0x30] sm:$0xf]
        %v413 = vld [vmem:[#allocation7 + $0x34] sm:$0xf]
        %v414 = vld [vmem:[#allocation7 + $0x38] sm:$0xf]
        %v415 = vld [vmem:[#allocation7 + $0x3c] sm:$0xf]
        %v416 = vld [vmem:[%s4] sm:$0x1]
        %v418 = vperm.slane %v416, 0
        %v436 = vunpack.c.l.b16 %v400
        %v437 = vunpack.c.l.b16 %v401
        %v438 = vunpack.c.l.b16 %v402
        %v439 = vunpack.c.l.b16 %v403
        %v440 = vunpack.c.l.b16 %v404
        %v441 = vunpack.c.l.b16 %v405
        %v442 = vunpack.c.l.b16 %v406
        %v443 = vunpack.c.l.b16 %v407
        %v444 = vunpack.c.l.b16 %v408
        %v445 = vunpack.c.l.b16 %v409
        %v446 = vunpack.c.l.b16 %v410
        %v447 = vunpack.c.l.b16 %v411
        %v448 = vunpack.c.l.b16 %v412
        %v449 = vunpack.c.l.b16 %v413
        %v450 = vunpack.c.l.b16 %v414
        %v451 = vunpack.c.l.b16 %v415
        %v452 = vpack.c.b16 %v437, %v436
        %v453 = vpack.c.b16 %v439, %v438
        %v454 = vpack.c.b16 %v441, %v440
        %v455 = vpack.c.b16 %v443, %v442
        %v456 = vpack.c.b16 %v445, %v444
        %v457 = vpack.c.b16 %v447, %v446
        %v458 = vpack.c.b16 %v449, %v448
        %v459 = vpack.c.b16 %v451, %v450
        %468 = vmatpush.bf16.msra.mxu0 %v459
        %469 = vmatpush.bf16.msra.mxu0 %v458
        %470 = vmatpush.bf16.msra.mxu0 %v457
        %471 = vmatpush.bf16.msra.mxu0 %v456
        %472 = vmatpush.bf16.msra.mxu0 %v455
        %473 = vmatpush.bf16.msra.mxu0 %v454
        %474 = vmatpush.bf16.msra.mxu0 %v453
        %475 = vmatpush.bf16.msra.mxu0 %v452
        %476 = vmatmul.bf16.gmra.mxu0 %v399
        %v477 = vpop.f32.mrf.mxu0
        %v478 = vadd.f32 %v418, %v477
        %v479 = vpop.f32.mrf.mxu0
        %v480 = vadd.f32 %v418, %v479
        %481 = vdwg.mxu0
        %v482 = vmax.f32 %v478, 0.0
        %v483 = vmax.f32 %v480, 0.0
        %v484 = vpack.c.bf16 %v483, %v482
        %v485 = vld [vmem:[#allocation8] sm:$0xf]
        %v486 = vld [vmem:[#allocation8 + $0x4] sm:$0xf]
        %v487 = vld [vmem:[#allocation8 + $0x8] sm:$0xf]
        %v488 = vld [vmem:[#allocation8 + $0xc] sm:$0xf]
        %v489 = vld [vmem:[#allocation8 + $0x10] sm:$0xf]
        %v490 = vld [vmem:[#allocation8 + $0x14] sm:$0xf]
        %v491 = vld [vmem:[#allocation8 + $0x18] sm:$0xf]
        %v492 = vld [vmem:[#allocation8 + $0x1c] sm:$0xf]
        %v493 = vld [vmem:[#allocation8 + $0x20] sm:$0xf]
        %v494 = vld [vmem:[#allocation8 + $0x24] sm:$0xf]
        %v495 = vld [vmem:[#allocation8 + $0x28] sm:$0xf]
        %v496 = vld [vmem:[#allocation8 + $0x2c] sm:$0xf]
        %v497 = vld [vmem:[#allocation8 + $0x30] sm:$0xf]
        %v498 = vld [vmem:[#allocation8 + $0x34] sm:$0xf]
        %v499 = vld [vmem:[#allocation8 + $0x38] sm:$0xf]
        %v500 = vld [vmem:[#allocation8 + $0x3c] sm:$0xf]
        %v501 = vld [vmem:[%s6] sm:$0x1]
        %v503 = vperm.slane %v501, 0
        %v521 = vunpack.c.l.b16 %v485
        %v522 = vunpack.c.l.b16 %v486
        %v523 = vunpack.c.l.b16 %v487
        %v524 = vunpack.c.l.b16 %v488
        %v525 = vunpack.c.l.b16 %v489
        %v526 = vunpack.c.l.b16 %v490
        %v527 = vunpack.c.l.b16 %v491
        %v528 = vunpack.c.l.b16 %v492
        %v529 = vunpack.c.l.b16 %v493
        %v530 = vunpack.c.l.b16 %v494
        %v531 = vunpack.c.l.b16 %v495
        %v532 = vunpack.c.l.b16 %v496
        %v533 = vunpack.c.l.b16 %v497
        %v534 = vunpack.c.l.b16 %v498
        %v535 = vunpack.c.l.b16 %v499
        %v536 = vunpack.c.l.b16 %v500
        %v537 = vpack.c.b16 %v522, %v521
        %v538 = vpack.c.b16 %v524, %v523
        %v539 = vpack.c.b16 %v526, %v525
        %v540 = vpack.c.b16 %v528, %v527
        %v541 = vpack.c.b16 %v530, %v529
        %v542 = vpack.c.b16 %v532, %v531
        %v543 = vpack.c.b16 %v534, %v533
        %v544 = vpack.c.b16 %v536, %v535
        %553 = vmatpush.bf16.msra.mxu0 %v544
        %554 = vmatpush.bf16.msra.mxu0 %v543
        %555 = vmatpush.bf16.msra.mxu0 %v542
        %556 = vmatpush.bf16.msra.mxu0 %v541
        %557 = vmatpush.bf16.msra.mxu0 %v540
        %558 = vmatpush.bf16.msra.mxu0 %v539
        %559 = vmatpush.bf16.msra.mxu0 %v538
        %560 = vmatpush.bf16.msra.mxu0 %v537
        %561 = vmatmul.bf16.gmra.mxu0 %v484
        %v562 = vpop.f32.mrf.mxu0
        %v563 = vadd.f32 %v503, %v562
        %v564 = vpop.f32.mrf.mxu0
        %v565 = vadd.f32 %v503, %v564
        %566 = vdwg.mxu0
        %v567 = vpack.c.bf16 %v563, %v563
        %v568 = vpack.c.bf16 %v565, %v565
        %569 = vst [vmem:[%s348] sm:$0xf] %v567
        %570 = vst [vmem:[%s348 + $0x4] sm:$0xf] %v568
        %s571 = sand.u32 %s186, 1
        %s572 = scalar_lea.sflag [#allocation4], %s571
        %s573 = sand.u32 %s186, 1
        %s574 = smul.addr %s573, 8
        %s575 = scalar_lea.vmem [#allocation10], %s574
        // Predicated region
        $region65: #{tpu_custom_call.1} parent=47 // pred_check
          %p576 = pneg %p196
        $region66: #{tpu_custom_call.1} parent=47 // pred_check_branch
          %578 = sbr.rel (%p576) target = $region68
        $region67: #{tpu_custom_call.1} parent=47 // pred_region
          %s579 = smul.u32 2, %s26
          %581 = vsyncadd %s572, 0
          %s582 = smul.addr %s579, 4
          %s583 = scalar_lea.hbm %s7, %s582
          %s584 = sshll.u32 %s575, 4
          %s585 = int_to_ptr.vmem [resolvable:$true] %s584
          %s586 = sshll.u32 %s583, 4
          %s587 = int_to_ptr.hbm [resolvable:$true] %s586
          %592 = dma.vmem_to_hbm [thread:$0]  %s585, 128, %s587, %s572, 64, 64, 4
        $region68: #{tpu_custom_call.1} parent=47 // pred_fallthru
          _
      $region48: #{tpu_custom_call.1} parent=5 // pred_fallthru
        _
      %p593 = scmp.le.s32.totalorder 2, %s21
      // Predicated region
      $region69: #{tpu_custom_call.1} parent=5 // pred_check
        %p594 = pneg %p593
      $region70: #{tpu_custom_call.1} parent=5 // pred_check_branch
        %596 = sbr.rel (%p594) target = $region72
      $region71: #{tpu_custom_call.1} parent=5 // pred_region
        %s597 = ssub.s32 %s21, 2
        // Predicated region
        $region73: #{tpu_custom_call.1} parent=71 // pred_check
          %p598 = pneg %p202
        $region74: #{tpu_custom_call.1} parent=71 // pred_check_branch
          %600 = sbr.rel (%p598) target = $region76
        $region75: #{tpu_custom_call.1} parent=71 // pred_region
          %s601 = sand.u32 %s187, 1
          %s602 = scalar_lea.sflag [#allocation4], %s601
          %s603 = sand.u32 %s187, 1
          %s604 = smul.addr %s603, 8
          %s605 = scalar_lea.vmem [#allocation10], %s604
          %607 = dma.done %s602, 128
        $region76: #{tpu_custom_call.1} parent=71 // pred_fallthru
          _
      $region72: #{tpu_custom_call.1} parent=5 // pred_fallthru
        _
    $region6: #{tpu_custom_call.1} parent=1 // loop_footer
      %s25 = sadd.s32 1, %s21
    $region7: #{tpu_custom_call.1} parent=1 // loop_footer_branch
      %20 = sbr.rel target = $region3
    $region8: #{tpu_custom_call.1} parent=1 // loop_exit
      _
    %608 = vsyncpa [#allocation3], 1
    %s609 = scalar_lea.sflag [#allocation3], 1
    %610 = vsyncpa %s609, 1
    %611 = vsyncpa [#allocation6], 1
    %612 = vsyncpa [#allocation9], 1
    %613 = vsyncpa [#allocation4], 1
    %s614 = scalar_lea.sflag [#allocation4], 1
    %615 = vsyncpa %s614, 1

</llo_original>
